<compile_context>
chip_gen: v7x
topology: tpu7x:2x2x1
jax: 0.10.0
libtpu: 0.0.40
codegen_flags: <defaults>
</compile_context>

<pallas_src>
import jax
import jax.numpy as jnp
from jax import lax
from jax.experimental import pallas as pl
from jax.experimental.pallas import tpu as pltpu

_EPS = 1e-12  # matches torch.nn.functional.normalize default


def _l2norm_kernel(x_ref, o_ref):
    # x_ref / o_ref: (TILE_N, C, HW) VMEM tiles. Normalize along axis=1 (C).
    x = x_ref[...].astype(jnp.float32)
    ss = jnp.sum(x * x, axis=1, keepdims=True)            # (TILE_N, 1, HW)
    # max(sqrt(ss), eps) == sqrt(max(ss, eps^2)) for ss >= 0, so a single
    # rsqrt (EUP) gives 1 / clamp_min(norm, eps).
    inv_norm = lax.rsqrt(jnp.maximum(ss, _EPS * _EPS))
    o_ref[...] = (x * inv_norm).astype(o_ref.dtype)


def _choose_tile_n(n: int, row_bytes: int, budget: int = 2 * 1024 * 1024) -> int:
    """Largest divisor of n whose tile stays under ~2 MiB per buffer."""
    t = max(1, min(n, budget // max(row_bytes, 1)))
    while n % t:
        t -= 1
    return t


def l2norm(x: jax.Array, dim: int = 1) -> jax.Array:
    """Pallas equivalent of L2Norm.forward: F.normalize(x, p=2, dim=1)."""
    assert x.ndim == 4, f"expected 4-D NCHW input, got {x.shape}"
    assert dim == 1, "this kernel implements the module default dim=1"
    N, C, H, W = x.shape
    HW = H * W

    # Lane-dense slab: reshape is metadata-only in XLA, done outside the kernel.
    x3 = x.reshape(N, C, HW)

    row_bytes = C * HW * x.dtype.itemsize
    tile_n = _choose_tile_n(N, row_bytes)
    grid = (N // tile_n,)

    out3 = pl.pallas_call(
        _l2norm_kernel,
        out_shape=jax.ShapeDtypeStruct((N, C, HW), x.dtype),
        grid=grid,
        in_specs=[pl.BlockSpec((tile_n, C, HW), lambda i: (i, 0, 0))],
        out_specs=pl.BlockSpec((tile_n, C, HW), lambda i: (i, 0, 0)),
        compiler_params=pltpu.CompilerParams(
            dimension_semantics=("parallel",)),
    )(x3)

    return out3.reshape(N, C, H, W)


if __name__ == "__main__":
    key = jax.random.PRNGKey(0)
    x = jax.random.normal(key, (2, 4, 16, 16), dtype=jnp.float32)

    out = jax.block_until_ready(l2norm(x))

    # Reference: F.normalize(x, p=2, dim=1) semantics in pure JAX.
    norm = jnp.sqrt(jnp.sum(x.astype(jnp.float32) ** 2, axis=1, keepdims=True))
    ref = (x / jnp.maximum(norm, _EPS)).astype(x.dtype)

    assert out.shape == x.shape, out.shape
    assert out.dtype == x.dtype, out.dtype
    assert jnp.allclose(out, ref, atol=1e-6, rtol=1e-6), "mismatch vs reference"

    print("KERNEL_OK")
</pallas_src>

<mosaic_0001>
module attributes {stable_mosaic.version = 11 : i64} {
  func.func @_l2norm_kernel(%arg0: i32, %arg1: memref<2x4x256xf32, #tpu.memory_space<vmem>>, %arg2: memref<2x4x256xf32, #tpu.memory_space<vmem>>) attributes {dimension_semantics = [#tpu.dimension_semantics<parallel>], iteration_bounds = array<i64: 1>, scalar_prefetch = 0 : i64, scratch_operands = 0 : i64, tpu.core_type = #tpu.core_type<tc>, window_params = [{transform_indices = @transform_0, window_bounds = array<i64: 2, 4, 256>}, {transform_indices = @transform_1, window_bounds = array<i64: 2, 4, 256>}]} {
    %c0 = arith.constant 0 : index
    %c0_0 = arith.constant 0 : index
    %c0_1 = arith.constant 0 : index
    %0 = vector.load %arg1[%c0, %c0_0, %c0_1] : memref<2x4x256xf32, #tpu.memory_space<vmem>>, vector<2x4x256xf32>
    %1 = arith.mulf %0, %0 : vector<2x4x256xf32>
    %cst = arith.constant dense<0.000000e+00> : vector<2x256xf32>
    %2 = vector.multi_reduction <add>, %1, %cst [1] : vector<2x4x256xf32> to vector<2x256xf32>
    %3 = vector.shape_cast %2 : vector<2x256xf32> to vector<2x1x256xf32>
    %cst_2 = arith.constant 1.000000e-24 : f32
    %4 = vector.broadcast %cst_2 : f32 to vector<2x1x256xf32>
    %5 = arith.maximumf %3, %4 : vector<2x1x256xf32>
    %6 = math.rsqrt %5 : vector<2x1x256xf32>
    %7 = vector.broadcast %6 : vector<2x1x256xf32> to vector<2x4x256xf32>
    %8 = arith.mulf %0, %7 : vector<2x4x256xf32>
    %c0_3 = arith.constant 0 : index
    %c0_4 = arith.constant 0 : index
    %c0_5 = arith.constant 0 : index
    %9 = vector.load %arg2[%c0_3, %c0_4, %c0_5] : memref<2x4x256xf32, #tpu.memory_space<vmem>>, vector<2x4x256xf32>
    tpu.vector_store %arg2[%c0_3, %c0_4, %c0_5], %8 {strides = array<i32>} : memref<2x4x256xf32, #tpu.memory_space<vmem>>, vector<2x4x256xf32>,
    return
  }
  func.func @transform_0(%arg0: i32) -> (i32, i32, i32) {
    %c0_i32 = arith.constant 0 : i32
    %c0_i32_0 = arith.constant 0 : i32
    %c0_i32_1 = arith.constant 0 : i32
    return %arg0, %c0_i32, %c0_i32_0 : i32, i32, i32
  }
  func.func @transform_1(%arg0: i32) -> (i32, i32, i32) {
    %c0_i32 = arith.constant 0 : i32
    %c0_i32_0 = arith.constant 0 : i32
    %c0_i32_1 = arith.constant 0 : i32
    return %arg0, %c0_i32, %c0_i32_0 : i32, i32, i32
  }
}

</mosaic_0001>

<llo_original>
// kernel: tpu_custom_call.1
$region0: #{tpu_custom_call.1}
  #allocation0 [shape = 'u32[]', space=smem, size = 0x4, offset = 0x4, fixed_abs, tag = 'smem constant byte address 0x4 - core index']
  #allocation1 [shape = 'u32[144,128]{1,0:T(1,128)}', space=vmem, size = 0x12000, scoped, tag = 'internal scratch']
  %s0 = inlined_call_operand.hbm [shape: f32[2,4,256], index: 0, kind: input, shape index: {}]
  %s1 = inlined_call_operand.hbm [shape: f32[2,4,256], index: 1, kind: output, shape index: {}]
  %s2 = sld [smem:[#allocation0]]
  $region18: #{tpu_custom_call.1} parent=0
    _
  %s4 = ssub.s32 1, %s2
  %s5 = scalar_select 0, %s4, %s2
  $region1: #{tpu_custom_call.1} parent=0
    #allocation2 [shape = 'u8[8192]{0}', space=vmem, size = 0x2000, scoped, tag = 'input window, operand 0, single buffered']
    #allocation3 [shape = 's32[1]{0}', space=sflag, size = 0x4, scoped, tag = 'scoped memory for tpu_custom_call.1']
    #allocation4 [shape = 's32[1]{0}', space=sflag, size = 0x4, scoped, tag = 'scoped memory for tpu_custom_call.1']
    #allocation5 [shape = 'u8[8192]{0}', space=vmem, size = 0x2000, scoped, tag = 'output window, operand 0, single buffered']
    %6 = vsyncpa [#allocation3], 0
    %7 = vsyncpa [#allocation4], 0
    // Predicated region
    $region2: #{tpu_custom_call.1} parent=1 // pred_check
      _
    $region3: #{tpu_custom_call.1} parent=1 // pred_check_branch
      %9 = sbr.rel (0) target = $region5
    $region4: #{tpu_custom_call.1} parent=1 // pred_region
      %s11 = ssub.s32 256, 256
      %12 = vsyncadd [#allocation3], %s11
      %s13 = sshll.u32 [#allocation2], 4
      %s14 = int_to_ptr.vmem [resolvable:$true] %s13
      %19 = dma.hbm_to_vmem [thread:$0]  %s0, 256, %s14, [#allocation3], 128, 128, 8
    $region5: #{tpu_custom_call.1} parent=1 // pred_fallthru
      _
    // Predicated region
    $region6: #{tpu_custom_call.1} parent=1 // pred_check
      _
    $region7: #{tpu_custom_call.1} parent=1 // pred_check_branch
      %21 = sbr.rel (0) target = $region9
    $region8: #{tpu_custom_call.1} parent=1 // pred_region
      %22 = dma.done [#allocation3], 256
    $region9: #{tpu_custom_call.1} parent=1 // pred_fallthru
      _
    %v23 = vld [vmem:[#allocation2] sm:$0xff]
    %v24 = vld [vmem:[#allocation2 + $0x8] sm:$0xff]
    %v25 = vmul.f32 %v23, %v23
    %v26 = vmul.f32 %v24, %v24
    %v29 = vcombine.high %v25, %v25
    %v30 = vcombine.high %v26, %v26
    %vm33 = vcmask 1043456
    %v34 = vsel %vm33, %v25, 0.0
    %v35 = vrot.slane %v34, 4
    %v36 = vadd.f32 %v34, %v35
    %v37 = vrot.slane %v36, 2
    %v38 = vadd.f32 %v36, %v37
    %v39 = vrot.slane %v38, 1
    %v40 = vadd.f32 %v38, %v39
    %v41 = vsel %vm33, %v29, 0.0
    %v42 = vrot.slane %v41, 4
    %v43 = vadd.f32 %v41, %v42
    %v44 = vrot.slane %v43, 2
    %v45 = vadd.f32 %v43, %v44
    %v46 = vrot.slane %v45, 1
    %v47 = vadd.f32 %v45, %v46
    %v48 = vsel %vm33, %v26, 0.0
    %v49 = vrot.slane %v48, 4
    %v50 = vadd.f32 %v48, %v49
    %v51 = vrot.slane %v50, 2
    %v52 = vadd.f32 %v50, %v51
    %v53 = vrot.slane %v52, 1
    %v54 = vadd.f32 %v52, %v53
    %v55 = vsel %vm33, %v30, 0.0
    %v56 = vrot.slane %v55, 4
    %v57 = vadd.f32 %v55, %v56
    %v58 = vrot.slane %v57, 2
    %v59 = vadd.f32 %v57, %v58
    %v60 = vrot.slane %v59, 1
    %v61 = vadd.f32 %v59, %v60
    %v62 = vmax.f32 %v40, 1e-24
    %v63 = vmax.f32 %v47, 1e-24
    %v64 = vmax.f32 %v54, 1e-24
    %v65 = vmax.f32 %v61, 1e-24
    %v66 = vrsqrt.pop %v62
    %v67 = vrsqrt.pop %v63
    %v68 = vrsqrt.pop %v64
    %v69 = vrsqrt.pop %v65
    %v74 = vcombine.low %v66, %v67
    %v75 = vcombine.low %v68, %v69
    %v78 = vmul.f32 %v23, %v74
    %v79 = vmul.f32 %v24, %v75
    %80 = vst [vmem:[#allocation5] sm:$0xff] %v78
    %81 = vst [vmem:[#allocation5 + $0x8] sm:$0xff] %v79
    // Predicated region
    $region10: #{tpu_custom_call.1} parent=1 // pred_check
      _
    $region11: #{tpu_custom_call.1} parent=1 // pred_check_branch
      %83 = sbr.rel (0) target = $region13
    $region12: #{tpu_custom_call.1} parent=1 // pred_region
      %s85 = ssub.s32 256, 256
      %86 = vsyncadd [#allocation4], %s85
      %s87 = sshll.u32 [#allocation5], 4
      %s88 = int_to_ptr.vmem [resolvable:$true] %s87
      %93 = dma.vmem_to_hbm [thread:$0]  %s88, 256, %s1, [#allocation4], 128, 128, 8
    $region13: #{tpu_custom_call.1} parent=1 // pred_fallthru
      _
    // Predicated region
    $region14: #{tpu_custom_call.1} parent=1 // pred_check
      _
    $region15: #{tpu_custom_call.1} parent=1 // pred_check_branch
      %95 = sbr.rel (0) target = $region17
    $region16: #{tpu_custom_call.1} parent=1 // pred_region
      %96 = dma.done [#allocation4], 256
    $region17: #{tpu_custom_call.1} parent=1 // pred_fallthru
      _
    %97 = vsyncpa [#allocation3], 1
    %98 = vsyncpa [#allocation4], 1

</llo_original>
